<compile_context>
chip_gen: v7x
topology: tpu7x:2x2x1
jax: 0.10.0
libtpu: 0.0.40
codegen_flags: <defaults>
</compile_context>

<pallas_src>
import functools
import math

import jax
import jax.numpy as jnp
from jax.experimental import pallas as pl
from jax.experimental.pallas import tpu as pltpu

MXU_DTYPE = jnp.bfloat16          # MXU operand dtype (f32 accumulation)
ROW_TILE = 512                    # max rows per grid step (VMEM-safe on v5e/v6e/v7x)


# ----------------------------------------------------------------------------
# tiling helpers
# ----------------------------------------------------------------------------

def _prod(shape):
    p = 1
    for d in shape:
        p *= d
    return p


def _pick_row_tile(m, max_tile=ROW_TILE):
    """Return (padded_rows, row_tile).  padded_rows % row_tile == 0, tile % 8 == 0."""
    mp = ((m + 7) // 8) * 8
    if mp <= max_tile:
        return mp, mp
    mp = ((m + max_tile - 1) // max_tile) * max_tile
    return mp, max_tile


def _pad_rows(x2, mp):
    m = x2.shape[0]
    if mp == m:
        return x2
    return jnp.pad(x2, ((0, mp - m), (0, 0)))


def _pick_group(n, max_g=8):
    g = min(n, max_g)
    while n % g:
        g -= 1
    return g


# ----------------------------------------------------------------------------
# Pallas kernels
# ----------------------------------------------------------------------------

def _linear_kernel(x_ref, w_ref, b_ref, o_ref, *, activation):
    x = x_ref[...].astype(MXU_DTYPE)
    y = jnp.dot(x, w_ref[...], preferred_element_type=jnp.float32) + b_ref[...]
    if activation == "relu":
        y = jnp.maximum(y, 0.0)
    elif activation == "sigmoid":
        y = jax.nn.sigmoid(y)
    o_ref[...] = y.astype(o_ref.dtype)


def linear(x, w, b, activation=None):
    """y = x @ w + b.  w: (K, N) (already transposed vs. torch), b: (N,)."""
    orig = x.shape
    K = orig[-1]
    N = w.shape[1]
    M = _prod(orig[:-1])
    x2 = _pad_rows(x.reshape(M, K).astype(jnp.float32), _pick_row_tile(M)[0])
    Mp, tm = _pick_row_tile(M)
    out = pl.pallas_call(
        functools.partial(_linear_kernel, activation=activation),
        out_shape=jax.ShapeDtypeStruct((Mp, N), jnp.float32),
        grid_spec=pltpu.PrefetchScalarGridSpec(
            num_scalar_prefetch=0,
            grid=(Mp // tm,),
            in_specs=[
                pl.BlockSpec((tm, K), lambda i: (i, 0)),
                pl.BlockSpec((K, N), lambda i: (0, 0)),
                pl.BlockSpec((1, N), lambda i: (0, 0)),
            ],
            out_specs=pl.BlockSpec((tm, N), lambda i: (i, 0)),
        ),
        compiler_params=pltpu.CompilerParams(dimension_semantics=("parallel",)),
    )(x2, w.astype(MXU_DTYPE), b.reshape(1, N).astype(jnp.float32))
    if Mp != M:
        out = out[:M]
    return out.reshape(orig[:-1] + (N,))


def _add_ln_kernel(x_ref, y_ref, g_ref, b_ref, o_ref, *, eps):
    z = x_ref[...] + y_ref[...]
    mu = jnp.mean(z, axis=-1, keepdims=True)
    var = jnp.mean(jnp.square(z - mu), axis=-1, keepdims=True)
    o_ref[...] = ((z - mu) * jax.lax.rsqrt(var + eps) * g_ref[...] + b_ref[...]).astype(o_ref.dtype)


def add_layer_norm(x, y, gamma, beta, eps=1e-5):
    """LayerNorm(x + y) fused in one kernel (residual + norm)."""
    orig = x.shape
    D = orig[-1]
    M = _prod(orig[:-1])
    Mp, tm = _pick_row_tile(M)
    x2 = _pad_rows(x.reshape(M, D).astype(jnp.float32), Mp)
    y2 = _pad_rows(y.reshape(M, D).astype(jnp.float32), Mp)
    out = pl.pallas_call(
        functools.partial(_add_ln_kernel, eps=eps),
        out_shape=jax.ShapeDtypeStruct((Mp, D), jnp.float32),
        grid_spec=pltpu.PrefetchScalarGridSpec(
            num_scalar_prefetch=0,
            grid=(Mp // tm,),
            in_specs=[
                pl.BlockSpec((tm, D), lambda i: (i, 0)),
                pl.BlockSpec((tm, D), lambda i: (i, 0)),
                pl.BlockSpec((1, D), lambda i: (0, 0)),
                pl.BlockSpec((1, D), lambda i: (0, 0)),
            ],
            out_specs=pl.BlockSpec((tm, D), lambda i: (i, 0)),
        ),
        compiler_params=pltpu.CompilerParams(dimension_semantics=("parallel",)),
    )(x2, y2, gamma.reshape(1, D).astype(jnp.float32), beta.reshape(1, D).astype(jnp.float32))
    if Mp != M:
        out = out[:M]
    return out.reshape(orig)


def _ffn_ln_kernel(x_ref, w1_ref, b1_ref, w2_ref, b2_ref, g_ref, be_ref, o_ref, *, eps):
    x = x_ref[...]
    h = jnp.dot(x.astype(MXU_DTYPE), w1_ref[...], preferred_element_type=jnp.float32) + b1_ref[...]
    h = jnp.maximum(h, 0.0)
    y = jnp.dot(h.astype(MXU_DTYPE), w2_ref[...], preferred_element_type=jnp.float32) + b2_ref[...]
    z = x + y
    mu = jnp.mean(z, axis=-1, keepdims=True)
    var = jnp.mean(jnp.square(z - mu), axis=-1, keepdims=True)
    o_ref[...] = ((z - mu) * jax.lax.rsqrt(var + eps) * g_ref[...] + be_ref[...]).astype(o_ref.dtype)


def ffn_block(x, w1, b1, w2, b2, gamma, beta, eps=1e-5):
    """LayerNorm(x + linear2(relu(linear1(x)))) fused in one kernel."""
    orig = x.shape
    D = orig[-1]
    F = w1.shape[1]
    M = _prod(orig[:-1])
    Mp, tm = _pick_row_tile(M)
    x2 = _pad_rows(x.reshape(M, D).astype(jnp.float32), Mp)
    out = pl.pallas_call(
        functools.partial(_ffn_ln_kernel, eps=eps),
        out_shape=jax.ShapeDtypeStruct((Mp, D), jnp.float32),
        grid_spec=pltpu.PrefetchScalarGridSpec(
            num_scalar_prefetch=0,
            grid=(Mp // tm,),
            in_specs=[
                pl.BlockSpec((tm, D), lambda i: (i, 0)),
                pl.BlockSpec((D, F), lambda i: (0, 0)),
                pl.BlockSpec((1, F), lambda i: (0, 0)),
                pl.BlockSpec((F, D), lambda i: (0, 0)),
                pl.BlockSpec((1, D), lambda i: (0, 0)),
                pl.BlockSpec((1, D), lambda i: (0, 0)),
                pl.BlockSpec((1, D), lambda i: (0, 0)),
            ],
            out_specs=pl.BlockSpec((tm, D), lambda i: (i, 0)),
        ),
        compiler_params=pltpu.CompilerParams(dimension_semantics=("parallel",)),
    )(x2, w1.astype(MXU_DTYPE), b1.reshape(1, F).astype(jnp.float32),
      w2.astype(MXU_DTYPE), b2.reshape(1, D).astype(jnp.float32),
      gamma.reshape(1, D).astype(jnp.float32), beta.reshape(1, D).astype(jnp.float32))
    if Mp != M:
        out = out[:M]
    return out.reshape(orig)


def _deform_proj_kernel(x_ref, w_ref, b_ref, o_ref, *, n_off, n_heads, group):
    """Fused sampling-offset + attention-weight projection with per-head softmax
    over the last `group` = n_levels*n_points columns of each head."""
    y = jnp.dot(x_ref[...].astype(MXU_DTYPE), w_ref[...],
                preferred_element_type=jnp.float32) + b_ref[...]
    o_ref[:, :n_off] = y[:, :n_off]
    for h in range(n_heads):
        s = n_off + h * group
        g = y[:, s:s + group]
        m = jnp.max(g, axis=-1, keepdims=True)
        e = jnp.exp(g - m)
        o_ref[:, s:s + group] = e * pl.reciprocal(
            jnp.sum(e, axis=-1, keepdims=True), approx=True)


def deform_proj(query, w, b, n_off, n_heads, group):
    orig = query.shape
    K = orig[-1]
    N = w.shape[1]
    M = _prod(orig[:-1])
    Mp, tm = _pick_row_tile(M)
    x2 = _pad_rows(query.reshape(M, K).astype(jnp.float32), Mp)
    out = pl.pallas_call(
        functools.partial(_deform_proj_kernel, n_off=n_off, n_heads=n_heads, group=group),
        out_shape=jax.ShapeDtypeStruct((Mp, N), jnp.float32),
        grid_spec=pltpu.PrefetchScalarGridSpec(
            num_scalar_prefetch=0,
            grid=(Mp // tm,),
            in_specs=[
                pl.BlockSpec((tm, K), lambda i: (i, 0)),
                pl.BlockSpec((K, N), lambda i: (0, 0)),
                pl.BlockSpec((1, N), lambda i: (0, 0)),
            ],
            out_specs=pl.BlockSpec((tm, N), lambda i: (i, 0)),
        ),
        compiler_params=pltpu.CompilerParams(dimension_semantics=("parallel",)),
    )(x2, w.astype(MXU_DTYPE), b.reshape(1, N).astype(jnp.float32))
    if Mp != M:
        out = out[:M]
    return out.reshape(orig[:-1] + (N,))


def _attn_kernel(q_ref, k_ref, v_ref, o_ref, *, scale):
    q = q_ref[...].astype(MXU_DTYPE)
    k = k_ref[...].astype(MXU_DTYPE)
    s = jnp.einsum("gqd,gkd->gqk", q, k, preferred_element_type=jnp.float32) * scale
    m = jnp.max(s, axis=-1, keepdims=True)
    p = jnp.exp(s - m)
    p = p * pl.reciprocal(jnp.sum(p, axis=-1, keepdims=True), approx=True)
    o_ref[...] = jnp.einsum("gqk,gkd->gqd", p.astype(MXU_DTYPE),
                            v_ref[...].astype(MXU_DTYPE),
                            preferred_element_type=jnp.float32).astype(o_ref.dtype)


def attention_core(q, k, v, scale):
    BH, Lq, Dh = q.shape
    Lk = k.shape[1]
    G = _pick_group(BH)
    return pl.pallas_call(
        functools.partial(_attn_kernel, scale=scale),
        out_shape=jax.ShapeDtypeStruct((BH, Lq, Dh), jnp.float32),
        grid_spec=pltpu.PrefetchScalarGridSpec(
            num_scalar_prefetch=0,
            grid=(BH // G,),
            in_specs=[
                pl.BlockSpec((G, Lq, Dh), lambda i: (i, 0, 0)),
                pl.BlockSpec((G, Lk, Dh), lambda i: (i, 0, 0)),
                pl.BlockSpec((G, Lk, Dh), lambda i: (i, 0, 0)),
            ],
            out_specs=pl.BlockSpec((G, Lq, Dh), lambda i: (i, 0, 0)),
        ),
        compiler_params=pltpu.CompilerParams(dimension_semantics=("parallel",)),
    )(q.astype(jnp.float32), k.astype(jnp.float32), v.astype(jnp.float32))


def _bmm_kernel(a_ref, b_ref, o_ref):
    o_ref[...] = jnp.einsum("gqk,gkd->gqd", a_ref[...].astype(MXU_DTYPE),
                            b_ref[...].astype(MXU_DTYPE),
                            preferred_element_type=jnp.float32).astype(o_ref.dtype)


def batched_matmul(a, b):
    """(BH, Lq, K) @ (BH, K, D) -> (BH, Lq, D), batched over heads on the MXU."""
    BH, Lq, K = a.shape
    Dh = b.shape[2]
    G = _pick_group(BH)
    return pl.pallas_call(
        _bmm_kernel,
        out_shape=jax.ShapeDtypeStruct((BH, Lq, Dh), jnp.float32),
        grid_spec=pltpu.PrefetchScalarGridSpec(
            num_scalar_prefetch=0,
            grid=(BH // G,),
            in_specs=[
                pl.BlockSpec((G, Lq, K), lambda i: (i, 0, 0)),
                pl.BlockSpec((G, K, Dh), lambda i: (i, 0, 0)),
            ],
            out_specs=pl.BlockSpec((G, Lq, Dh), lambda i: (i, 0, 0)),
        ),
        compiler_params=pltpu.CompilerParams(dimension_semantics=("parallel",)),
    )(a.astype(jnp.float32), b.astype(jnp.float32))


# ----------------------------------------------------------------------------
# nn.MultiheadAttention (decoder self-attention)
# ----------------------------------------------------------------------------

def multihead_attention(p, qk_in, v_in, nhead):
    """Self-attention where query == key (Deformable-DETR decoder)."""
    B, Lq, D = qk_in.shape
    Dh = D // nhead
    w, b = p["in_proj_w"], p["in_proj_b"]
    qk = linear(qk_in, w[:, :2 * D], b[:2 * D])      # fused Q/K projection (d -> 2d)
    v = linear(v_in, w[:, 2 * D:], b[2 * D:])        # V projection
    q, k = qk[..., :D], qk[..., D:]

    def split_heads(t):
        return t.reshape(B, Lq, nhead, Dh).transpose(0, 2, 1, 3).reshape(B * nhead, Lq, Dh)

    oh = attention_core(split_heads(q), split_heads(k), split_heads(v), 1.0 / math.sqrt(Dh))
    o = oh.reshape(B, nhead, Lq, Dh).transpose(0, 2, 1, 3).reshape(B, Lq, D)
    return linear(o, p["out_proj_w"], p["out_proj_b"])


# ----------------------------------------------------------------------------
# MSDeformAttn (multi-scale deformable attention)
# ----------------------------------------------------------------------------

def ms_deform_attn_core(value, spatial_shapes_list, sampling_locations, attention_weights):
    """Bilinear sampling expressed as (bilinear+attention weights) matrix @ value,
    so the gather becomes an MXU batched matmul instead of a serialized gather.
    grid_sample(mode=bilinear, padding_mode=zeros, align_corners=False) semantics."""
    B, Lin, H, Dh = value.shape
    _, Lq, _, L, P, _ = sampling_locations.shape
    BH = B * H
    v = value.transpose(0, 2, 1, 3).reshape(BH, Lin, Dh)           # (BH, Lin, Dh)

    mats = []
    for lid, (Hl, Wl) in enumerate(spatial_shapes_list):
        HW = Hl * Wl
        loc = sampling_locations[:, :, :, lid].transpose(0, 2, 1, 3, 4).reshape(BH, Lq, P, 2)
        aw = attention_weights[:, :, :, lid].transpose(0, 2, 1, 3).reshape(BH, Lq, P)
        x = loc[..., 0] * Wl - 0.5
        y = loc[..., 1] * Hl - 0.5
        x0 = jnp.floor(x)
        y0 = jnp.floor(y)
        wx1 = x - x0
        wy1 = y - y0
        cols = jnp.arange(HW, dtype=jnp.int32)
        # TODO(synk): at real Deformable-DETR scale (HW ~ 10k) replace the one-hot
        # construction with a scalar-prefetch / manual-DMA gather kernel (P2/P4).
        A = jnp.zeros((BH, Lq, P, HW), jnp.float32)
        for dy, wy in ((0, 1.0 - wy1), (1, wy1)):
            for dx, wx in ((0, 1.0 - wx1), (1, wx1)):
                xi = x0.astype(jnp.int32) + dx
                yi = y0.astype(jnp.int32) + dy
                valid = (xi >= 0) & (xi < Wl) & (yi >= 0) & (yi < Hl)
                idx = jnp.clip(yi, 0, Hl - 1) * Wl + jnp.clip(xi, 0, Wl - 1)
                onehot = (idx[..., None] == cols).astype(jnp.float32)
                wc = (wy * wx * valid.astype(jnp.float32))[..., None]
                A = A + wc * onehot
        # fold attention weights and sum over points -> (BH, Lq, HW)
        mats.append(jnp.sum(A * aw[..., None], axis=2))
    A_full = jnp.concatenate(mats, axis=-1)                        # (BH, Lq, Lin)
    out = batched_matmul(A_full, v)                                # (BH, Lq, Dh)
    return out.reshape(B, H, Lq, Dh).transpose(0, 2, 1, 3).reshape(B, Lq, H * Dh)


def ms_deform_attn_forward(p, query, reference_points, input_flatten,
                           spatial_shapes_list, level_start_list,
                           n_heads, n_points, padding_mask=None):
    B, Lq, D = query.shape
    Lin = input_flatten.shape[1]
    L = len(spatial_shapes_list)
    P = n_points
    H = n_heads
    Dh = D // H
    LP = L * P
    n_off = H * L * P * 2

    value = linear(input_flatten, p["value_proj_w"], p["value_proj_b"])
    if padding_mask is not None:
        value = jnp.where(padding_mask[..., None], 0.0, value)
    value = value.reshape(B, Lin, H, Dh)

    # one fused matmul for sampling offsets + attention weights, softmax in epilogue
    proj = deform_proj(query, p["deform_proj_w"], p["deform_proj_b"], n_off, H, LP)
    sampling_offsets = proj[..., :n_off].reshape(B, Lq, H, L, P, 2)
    attn = proj[..., n_off:].reshape(B, Lq, H, L, P)

    # reference_points: (B, Lq, L, 2) normalized; offsets normalized by (W, H)
    offset_normalizer = jnp.array([[w, h] for (h, w) in spatial_shapes_list],
                                  dtype=jnp.float32)
    sampling_locations = (reference_points[:, :, None, :, None, :]
                          + sampling_offsets
                          / offset_normalizer[None, None, None, :, None, :])
    out = ms_deform_attn_core(value, spatial_shapes_list, sampling_locations, attn)
    return linear(out, p["output_proj_w"], p["output_proj_b"])


# ----------------------------------------------------------------------------
# Encoder / decoder layers
# ----------------------------------------------------------------------------

def encoder_layer_forward(p, src, pos, reference_points, spatial_shapes_list,
                          level_start_list, nhead, n_points, padding_mask=None):
    q = src + pos if pos is not None else src
    src2 = ms_deform_attn_forward(p["self_attn"], q, reference_points, src,
                                  spatial_shapes_list, level_start_list,
                                  nhead, n_points, padding_mask)
    src = add_layer_norm(src, src2, p["norm1"]["g"], p["norm1"]["b"])
    src = ffn_block(src, p["linear1_w"], p["linear1_b"], p["linear2_w"], p["linear2_b"],
                    p["norm2"]["g"], p["norm2"]["b"])
    return src


def encoder_reference_points(spatial_shapes_list, valid_ratios):
    ref_list = []
    for lvl, (Hl, Wl) in enumerate(spatial_shapes_list):
        ys = jnp.linspace(0.5, Hl - 0.5, Hl, dtype=jnp.float32)
        xs = jnp.linspace(0.5, Wl - 0.5, Wl, dtype=jnp.float32)
        ref_y, ref_x = jnp.meshgrid(ys, xs, indexing="ij")
        ref_y = ref_y.reshape(-1)[None] / (valid_ratios[:, None, lvl, 1] * Hl)
        ref_x = ref_x.reshape(-1)[None] / (valid_ratios[:, None, lvl, 0] * Wl)
        ref_list.append(jnp.stack((ref_x, ref_y), -1))            # (B, HW, 2)
    reference_points = jnp.concatenate(ref_list, axis=1)          # (B, total, 2)
    return reference_points[:, :, None] * valid_ratios[:, None]   # (B, total, L, 2)


def decoder_layer_forward(p, tgt, query_pos, reference_points, src,
                          spatial_shapes_list, level_start_list,
                          nhead, n_points, padding_mask=None):
    qk = (tgt + query_pos) if query_pos is not None else tgt
    tgt2 = multihead_attention(p["self_attn"], qk, tgt, nhead)
    tgt = add_layer_norm(tgt, tgt2, p["norm2"]["g"], p["norm2"]["b"])

    q2 = (tgt + query_pos) if query_pos is not None else tgt
    tgt2 = ms_deform_attn_forward(p["cross_attn"], q2, reference_points, src,
                                  spatial_shapes_list, level_start_list,
                                  nhead, n_points, padding_mask)
    tgt = add_layer_norm(tgt, tgt2, p["norm1"]["g"], p["norm1"]["b"])

    tgt = ffn_block(tgt, p["linear1_w"], p["linear1_b"], p["linear2_w"], p["linear2_b"],
                    p["norm3"]["g"], p["norm3"]["b"])
    return tgt


def decoder_forward(layers_params, tgt, reference_points, src, spatial_shapes_list,
                    level_start_list, valid_ratios, query_pos,
                    nhead, n_points, padding_mask=None):
    output = tgt
    # bbox_embed is None -> reference points are constant across layers; hoist.
    ref_input = reference_points[:, :, None] * valid_ratios[:, None]   # (B, Q, L, 2)
    for lp in layers_params:
        output = decoder_layer_forward(lp, output, query_pos, ref_input, src,
                                       spatial_shapes_list, level_start_list,
                                       nhead, n_points, padding_mask)
    # bbox_embed is None and return_intermediate=False in the reference config
    return output, reference_points


# ----------------------------------------------------------------------------
# DeformableTransformer.forward (two_stage=False)
# ----------------------------------------------------------------------------

def deformable_transformer_forward(params, cfg, srcs, masks, pos_embeds, query_embed):
    src_flat, mask_flat, lvl_pos_flat, spatial_shapes_list = [], [], [], []
    for lvl, (src, mask, pos) in enumerate(zip(srcs, masks, pos_embeds)):
        b, c, h, w = src.shape
        spatial_shapes_list.append((h, w))
        s = src.reshape(b, c, h * w).transpose(0, 2, 1)           # (B, HW, C)
        p_ = pos.reshape(b, c, h * w).transpose(0, 2, 1)
        lvl_pos_flat.append(p_ + params["level_embed"][lvl][None, None, :])
        src_flat.append(s)
        mask_flat.append(mask.reshape(b, h * w))
    src_flatten = jnp.concatenate(src_flat, axis=1)
    mask_flatten = jnp.concatenate(mask_flat, axis=1)
    lvl_pos_embed_flatten = jnp.concatenate(lvl_pos_flat, axis=1)

    level_start_list = [0]
    for (h, w) in spatial_shapes_list[:-1]:
        level_start_list.append(level_start_list[-1] + h * w)

    def valid_ratio(mask):
        _, H, W = mask.shape
        valid_H = jnp.sum(~mask[:, :, 0], axis=1)
        valid_W = jnp.sum(~mask[:, 0, :], axis=1)
        return jnp.stack([valid_W.astype(jnp.float32) / W,
                          valid_H.astype(jnp.float32) / H], -1)

    valid_ratios = jnp.stack([valid_ratio(m) for m in masks], axis=1)   # (B, L, 2)

    # ------- encoder -------
    reference_points = encoder_reference_points(spatial_shapes_list, valid_ratios)
    memory = src_flatten
    for lp in params["encoder"]:
        memory = encoder_layer_forward(lp, memory, lvl_pos_embed_flatten,
                                       reference_points, spatial_shapes_list,
                                       level_start_list, cfg["nhead"],
                                       cfg["enc_n_points"], mask_flatten)

    bs, _, c = memory.shape
    # ------- decoder (1-stage path) -------
    query_pos, tgt = query_embed[:, :c], query_embed[:, c:]
    query_pos = jnp.broadcast_to(query_pos[None], (bs,) + query_pos.shape)
    tgt = jnp.broadcast_to(tgt[None], (bs,) + tgt.shape)
    reference_points_q = linear(query_pos, params["reference_points_w"],
                                params["reference_points_b"], activation="sigmoid")
    init_reference_out = reference_points_q

    hs, inter_references = decoder_forward(params["decoder"], tgt, reference_points_q,
                                           memory, spatial_shapes_list, level_start_list,
                                           valid_ratios, query_pos, cfg["nhead"],
                                           cfg["dec_n_points"], mask_flatten)
    return hs, init_reference_out, inter_references, None, None


# ----------------------------------------------------------------------------
# Deterministic parameter initialization
# ----------------------------------------------------------------------------

def init_params(key, cfg):
    d, ffn = cfg["d_model"], cfg["d_ffn"]
    H, L = cfg["nhead"], cfg["n_levels"]
    keys = iter(jax.random.split(key, 512))

    def xavier(shape):
        lim = math.sqrt(6.0 / (shape[0] + shape[1]))
        return jax.random.uniform(next(keys), shape, jnp.float32, -lim, lim)

    def zeros(shape):
        return jnp.zeros(shape, jnp.float32)

    def ones(shape):
        return jnp.ones(shape, jnp.float32)

    def ln():
        return {"g": ones((d,)), "b": zeros((d,))}

    def msdeform_params(P):
        thetas = jnp.arange(H, dtype=jnp.float32) * (2.0 * math.pi / H)
        grid_init = jnp.stack([jnp.cos(thetas), jnp.sin(thetas)], -1)
        grid_init = grid_init / jnp.max(jnp.abs(grid_init), axis=-1, keepdims=True)
        grid_init = jnp.tile(grid_init[:, None, None, :], (1, L, P, 1))
        grid_init = grid_init * (jnp.arange(P, dtype=jnp.float32) + 1.0)[None, None, :, None]
        off_w = 0.01 * jax.random.normal(next(keys), (d, H * L * P * 2), jnp.float32)
        attn_w = 0.01 * jax.random.normal(next(keys), (d, H * L * P), jnp.float32)
        return {
            # fused sampling_offsets + attention_weights projection
            "deform_proj_w": jnp.concatenate([off_w, attn_w], axis=1),
            "deform_proj_b": jnp.concatenate([grid_init.reshape(-1), zeros((H * L * P,))]),
            "value_proj_w": xavier((d, d)),
            "value_proj_b": zeros((d,)),
            "output_proj_w": xavier((d, d)),
            "output_proj_b": zeros((d,)),
        }

    enc_layers = []
    for _ in range(cfg["num_encoder_layers"]):
        enc_layers.append({
            "self_attn": msdeform_params(cfg["enc_n_points"]),
            "norm1": ln(),
            "linear1_w": xavier((d, ffn)), "linear1_b": zeros((ffn,)),
            "linear2_w": xavier((ffn, d)), "linear2_b": zeros((d,)),
            "norm2": ln(),
        })

    dec_layers = []
    for _ in range(cfg["num_decoder_layers"]):
        dec_layers.append({
            "cross_attn": msdeform_params(cfg["dec_n_points"]),
            "norm1": ln(),
            "self_attn": {
                "in_proj_w": xavier((d, 3 * d)),
                "in_proj_b": zeros((3 * d,)),
                "out_proj_w": xavier((d, d)),
                "out_proj_b": zeros((d,)),
            },
            "norm2": ln(),
            "linear1_w": xavier((d, ffn)), "linear1_b": zeros((ffn,)),
            "linear2_w": xavier((ffn, d)), "linear2_b": zeros((d,)),
            "norm3": ln(),
        })

    return {
        "encoder": enc_layers,
        "decoder": dec_layers,
        "level_embed": jax.random.normal(next(keys), (L, d), jnp.float32),
        "reference_points_w": xavier((d, 2)),
        "reference_points_b": zeros((2,)),
    }


# ----------------------------------------------------------------------------
# Main
# ----------------------------------------------------------------------------

if __name__ == "__main__":
    cfg = dict(d_model=32, nhead=4, num_encoder_layers=2, num_decoder_layers=2,
               d_ffn=64, n_levels=2, enc_n_points=2, dec_n_points=2, num_queries=16)

    key = jax.random.PRNGKey(0)
    kp, kd, kq = jax.random.split(key, 3)
    params = init_params(kp, cfg)

    B = 2
    level_hw = [(8, 8), (4, 4)]
    srcs, pos_embeds, masks = [], [], []
    data_keys = jax.random.split(kd, 2 * len(level_hw))
    for i, (h, w) in enumerate(level_hw):
        srcs.append(jax.random.normal(data_keys[2 * i], (B, cfg["d_model"], h, w), jnp.float32))
        pos_embeds.append(jax.random.normal(data_keys[2 * i + 1], (B, cfg["d_model"], h, w), jnp.float32))
        masks.append(jnp.zeros((B, h, w), dtype=bool))
    query_embed = jax.random.normal(kq, (cfg["num_queries"], 2 * cfg["d_model"]), jnp.float32)

    hs, init_ref, inter_ref, _, _ = deformable_transformer_forward(
        params, cfg, srcs, masks, pos_embeds, query_embed)

    jax.block_until_ready(hs)
    jax.block_until_ready(init_ref)
    jax.block_until_ready(inter_ref)

    assert hs.shape == (B, cfg["num_queries"], cfg["d_model"])
    assert init_ref.shape == (B, cfg["num_queries"], 2)
    assert inter_ref.shape == (B, cfg["num_queries"], 2)
    print("KERNEL_OK")
</pallas_src>

<mosaic_0001>
module attributes {stable_mosaic.version = 11 : i64} {
  func.func @_linear_kernel(%arg0: i32, %arg1: memref<160x32xf32, #tpu.memory_space<vmem>>, %arg2: memref<32x32xbf16, #tpu.memory_space<vmem>>, %arg3: memref<1x32xf32, #tpu.memory_space<vmem>>, %arg4: memref<160x32xf32, #tpu.memory_space<vmem>>) attributes {dimension_semantics = [#tpu.dimension_semantics<parallel>], iteration_bounds = array<i64: 1>, scalar_prefetch = 0 : i64, scratch_operands = 0 : i64, tpu.core_type = #tpu.core_type<tc>, window_params = [{transform_indices = @transform_0, window_bounds = array<i64: 160, 32>}, {pipeline_mode = #tpu.pipeline_mode<synchronous>, transform_indices = @transform_1, window_bounds = array<i64: 32, 32>}, {pipeline_mode = #tpu.pipeline_mode<synchronous>, transform_indices = @transform_2, window_bounds = array<i64: 1, 32>}, {transform_indices = @transform_3, window_bounds = array<i64: 160, 32>}]} {
    %c0 = arith.constant 0 : index
    %c0_0 = arith.constant 0 : index
    %0 = vector.load %arg1[%c0, %c0_0] : memref<160x32xf32, #tpu.memory_space<vmem>>, vector<160x32xf32>
    %1 = arith.truncf %0 : vector<160x32xf32> to vector<160x32xbf16>
    %c0_1 = arith.constant 0 : index
    %c0_2 = arith.constant 0 : index
    %2 = vector.load %arg2[%c0_1, %c0_2] : memref<32x32xbf16, #tpu.memory_space<vmem>>, vector<32x32xbf16>
    %cst = arith.constant dense<0.000000e+00> : vector<160x32xf32>
    %3 = tpu.matmul %1, %2, %cst {dimension_numbers = #tpu.dot_dimension_numbers<[1], [0], [0], [1], [0, 0, 1, 1], [], []>} : vector<160x32xbf16>, vector<32x32xbf16>, vector<160x32xf32> -> vector<160x32xf32>
    %c0_3 = arith.constant 0 : index
    %c0_4 = arith.constant 0 : index
    %4 = vector.load %arg3[%c0_3, %c0_4] : memref<1x32xf32, #tpu.memory_space<vmem>>, vector<1x32xf32>
    %5 = vector.broadcast %4 : vector<1x32xf32> to vector<160x32xf32>
    %6 = arith.addf %3, %5 : vector<160x32xf32>
    %c0_5 = arith.constant 0 : index
    %c0_6 = arith.constant 0 : index
    %7 = vector.load %arg4[%c0_5, %c0_6] : memref<160x32xf32, #tpu.memory_space<vmem>>, vector<160x32xf32>
    tpu.vector_store %arg4[%c0_5, %c0_6], %6 {strides = array<i32>} : memref<160x32xf32, #tpu.memory_space<vmem>>, vector<160x32xf32>,
    return
  }
  func.func @transform_0(%arg0: i32) -> (i32, i32) {
    %c0_i32 = arith.constant 0 : i32
    %c0_i32_0 = arith.constant 0 : i32
    return %arg0, %c0_i32 : i32, i32
  }
  func.func @transform_1(%arg0: i32) -> (i32, i32) {
    %c0_i32 = arith.constant 0 : i32
    %c0_i32_0 = arith.constant 0 : i32
    %c0_i32_1 = arith.constant 0 : i32
    return %c0_i32, %c0_i32_0 : i32, i32
  }
  func.func @transform_2(%arg0: i32) -> (i32, i32) {
    %c0_i32 = arith.constant 0 : i32
    %c0_i32_0 = arith.constant 0 : i32
    %c0_i32_1 = arith.constant 0 : i32
    return %c0_i32, %c0_i32_0 : i32, i32
  }
  func.func @transform_3(%arg0: i32) -> (i32, i32) {
    %c0_i32 = arith.constant 0 : i32
    %c0_i32_0 = arith.constant 0 : i32
    return %arg0, %c0_i32 : i32, i32
  }
}

</mosaic_0001>

<llo_original>
// kernel: tpu_custom_call.1
$region0: #{tpu_custom_call.1}
  #allocation0 [shape = 'u32[]', space=smem, size = 0x4, offset = 0x4, fixed_abs, tag = 'smem constant byte address 0x4 - core index']
  #allocation1 [shape = 'u32[144,128]{1,0:T(1,128)}', space=vmem, size = 0x12000, scoped, tag = 'internal scratch']
  %s0 = inlined_call_operand.vmem [shape: f32[160,32], index: 0, kind: input, shape index: {}]
  %s1 = inlined_call_operand.vmem [shape: bf16[32,32], index: 1, kind: input, shape index: {}]
  %s2 = inlined_call_operand.vmem [shape: f32[1,32], index: 2, kind: input, shape index: {}]
  %s3 = inlined_call_operand.vmem [shape: f32[160,32], index: 3, kind: output, shape index: {}]
  %s4 = sld [smem:[#allocation0]]
  $region22: #{tpu_custom_call.1} parent=0
    _
  %s6 = ssub.s32 1, %s4
  %s7 = scalar_select 0, %s6, %s4
  // Predicated region
  $region2: #{tpu_custom_call.1} parent=0 // pred_check
    _
  $region3: #{tpu_custom_call.1} parent=0 // pred_check_branch
    %9 = sbr.rel (0) target = $region5
  $region4: #{tpu_custom_call.1} parent=0 // pred_region
    _
  $region5: #{tpu_custom_call.1} parent=0 // pred_fallthru
    _
  // Predicated region
  $region6: #{tpu_custom_call.1} parent=0 // pred_check
    _
  $region7: #{tpu_custom_call.1} parent=0 // pred_check_branch
    %11 = sbr.rel (0) target = $region9
  $region8: #{tpu_custom_call.1} parent=0 // pred_region
    _
  $region9: #{tpu_custom_call.1} parent=0 // pred_fallthru
    _
  // Predicated region
  $region10: #{tpu_custom_call.1} parent=0 // pred_check
    _
  $region11: #{tpu_custom_call.1} parent=0 // pred_check_branch
    %13 = sbr.rel (0) target = $region13
  $region12: #{tpu_custom_call.1} parent=0 // pred_region
    _
  $region13: #{tpu_custom_call.1} parent=0 // pred_fallthru
    _
  %v15 = vld [vmem:[%s0] sm:$0xff]
  %v16 = vld [vmem:[%s0 + $0x8] sm:$0xff]
  %v17 = vld [vmem:[%s0 + $0x10] sm:$0xff]
  %v18 = vld [vmem:[%s0 + $0x18] sm:$0xff]
  %v19 = vld [vmem:[%s0 + $0x20] sm:$0xff]
  %v20 = vld [vmem:[%s0 + $0x28] sm:$0xff]
  %v21 = vld [vmem:[%s0 + $0x30] sm:$0xff]
  %v22 = vld [vmem:[%s0 + $0x38] sm:$0xff]
  %v23 = vld [vmem:[%s0 + $0x40] sm:$0xff]
  %v24 = vld [vmem:[%s0 + $0x48] sm:$0xff]
  %v25 = vld [vmem:[%s0 + $0x50] sm:$0xff]
  %v26 = vld [vmem:[%s0 + $0x58] sm:$0xff]
  %v27 = vld [vmem:[%s0 + $0x60] sm:$0xff]
  %v28 = vld [vmem:[%s0 + $0x68] sm:$0xff]
  %v29 = vld [vmem:[%s0 + $0x70] sm:$0xff]
  %v30 = vld [vmem:[%s0 + $0x78] sm:$0xff]
  %v31 = vld [vmem:[%s0 + $0x80] sm:$0xff]
  %v32 = vld [vmem:[%s0 + $0x88] sm:$0xff]
  %v33 = vld [vmem:[%s0 + $0x90] sm:$0xff]
  %v34 = vld [vmem:[%s0 + $0x98] sm:$0xff]
  %v35 = vpack.c.bf16 %v16, %v15
  %v36 = vpack.c.bf16 %v18, %v17
  %v37 = vpack.c.bf16 %v20, %v19
  %v38 = vpack.c.bf16 %v22, %v21
  %v39 = vpack.c.bf16 %v24, %v23
  %v40 = vpack.c.bf16 %v26, %v25
  %v41 = vpack.c.bf16 %v28, %v27
  %v42 = vpack.c.bf16 %v30, %v29
  %v43 = vpack.c.bf16 %v32, %v31
  %v44 = vpack.c.bf16 %v34, %v33
  %v45 = vld [vmem:[%s1] sm:$0xf]
  %v46 = vld [vmem:[%s1 + $0x4] sm:$0xf]
  %v47 = vld [vmem:[%s1 + $0x8] sm:$0xf]
  %v48 = vld [vmem:[%s1 + $0xc] sm:$0xf]
  %v49 = vld [vmem:[%s2] sm:$0x1]
  %v51 = vlaneseq
  %v52 = vshrl.u32 %v51, 7
  %v53 = vsub.s32 0, %v52
  %v54 = vrot.slane %v49, %v53
  %v60 = vunpack.c.l.b16 %v45
  %v61 = vunpack.c.l.b16 %v46
  %v62 = vunpack.c.l.b16 %v47
  %v63 = vunpack.c.l.b16 %v48
  %v64 = vpack.c.b16 %v61, %v60
  %v65 = vpack.c.b16 %v63, %v62
  %vm68 = vcmask 261120
  %v70 = vsel %vm68, %v35, 0
  %v73 = vsel %vm68, %v36, 0
  %v76 = vsel %vm68, %v37, 0
  %v79 = vsel %vm68, %v38, 0
  %v82 = vsel %vm68, %v39, 0
  %v85 = vsel %vm68, %v40, 0
  %v88 = vsel %vm68, %v41, 0
  %v91 = vsel %vm68, %v42, 0
  %v94 = vsel %vm68, %v43, 0
  %v97 = vsel %vm68, %v44, 0
  %99 = vmatprep.subr.bf16.mxu0 0
  %100 = vmatpush1.bf16.msra.mxu0 %v64
  %101 = vmatprep.subr.bf16.mxu0 0
  %102 = vmatpush1.bf16.msra.mxu0 %v65
  %103 = vmatprep.subr.bf16.mxu0 0
  %104 = vmatpush1.bf16.msra.mxu0 0
  %105 = vmatprep.subr.bf16.mxu0 0
  %106 = vmatpush1.bf16.msra.mxu0 0
  %107 = vmatprep.subr.bf16.mxu0 0
  %108 = vmatpush1.bf16.msra.mxu0 0
  %109 = vmatprep.subr.bf16.mxu0 0
  %110 = vmatpush1.bf16.msra.mxu0 0
  %111 = vmatprep.subr.bf16.mxu0 0
  %112 = vmatpush1.bf16.msra.mxu0 0
  %113 = vmatprep.subr.bf16.mxu0 0
  %114 = vmatpush1.bf16.msra.mxu0 0
  %115 = vmatprep.subr.bf16.mxu0 0
  %116 = vmatpush1.bf16.msra.mxu0 0
  %117 = vmatprep.subr.bf16.mxu0 0
  %118 = vmatpush1.bf16.msra.mxu0 0
  %119 = vmatprep.subr.bf16.mxu0 0
  %120 = vmatpush1.bf16.msra.mxu0 0
  %121 = vmatprep.subr.bf16.mxu0 0
  %122 = vmatpush1.bf16.msra.mxu0 0
  %123 = vmatprep.subr.bf16.mxu0 0
  %124 = vmatpush1.bf16.msra.mxu0 0
  %125 = vmatprep.subr.bf16.mxu0 0
  %126 = vmatpush1.bf16.msra.mxu0 0
  %127 = vmatprep.subr.bf16.mxu0 0
  %128 = vmatpush1.bf16.msra.mxu0 0
  %129 = vmatprep.subr.bf16.mxu0 0
  %130 = vmatpush1.bf16.msra.mxu0 0
  %131 = vmatprep.mubr.bf16.mxu0 0
  %132 = vmatmul.mubr.bf16.gmra.mrb[0].mxu0 %v70
  %v133 = vpop.f32.mrb[0].mxu0
  %v134 = vadd.f32 %v54, %v133
  %v135 = vpop.f32.mrb[0].mxu0
  %v136 = vpop.f32.mrb[0].mxu0
  %v137 = vadd.f32 %v54, %v136
  %v138 = vpop.f32.mrb[0].mxu0
  %139 = vmatprep.mubr.bf16.mxu0 0
  %140 = vmatmul.mubr.bf16.gmra.mrb[0].mxu0 %v73
  %v141 = vpop.f32.mrb[0].mxu0
  %v142 = vadd.f32 %v54, %v141
  %v143 = vpop.f32.mrb[0].mxu0
  %v144 = vpop.f32.mrb[0].mxu0
  %v145 = vadd.f32 %v54, %v144
  %v146 = vpop.f32.mrb[0].mxu0
  %147 = vmatprep.mubr.bf16.mxu0 0
  %148 = vmatmul.mubr.bf16.gmra.mrb[0].mxu0 %v76
  %v149 = vpop.f32.mrb[0].mxu0
  %v150 = vadd.f32 %v54, %v149
  %v151 = vpop.f32.mrb[0].mxu0
  %v152 = vpop.f32.mrb[0].mxu0
  %v153 = vadd.f32 %v54, %v152
  %v154 = vpop.f32.mrb[0].mxu0
  %155 = vmatprep.mubr.bf16.mxu0 0
  %156 = vmatmul.mubr.bf16.gmra.mrb[0].mxu0 %v79
  %v157 = vpop.f32.mrb[0].mxu0
  %v158 = vadd.f32 %v54, %v157
  %v159 = vpop.f32.mrb[0].mxu0
  %v160 = vpop.f32.mrb[0].mxu0
  %v161 = vadd.f32 %v54, %v160
  %v162 = vpop.f32.mrb[0].mxu0
  %163 = vmatprep.mubr.bf16.mxu0 0
  %164 = vmatmul.mubr.bf16.gmra.mrb[0].mxu0 %v82
  %v165 = vpop.f32.mrb[0].mxu0
  %v166 = vadd.f32 %v54, %v165
  %v167 = vpop.f32.mrb[0].mxu0
  %v168 = vpop.f32.mrb[0].mxu0
  %v169 = vadd.f32 %v54, %v168
  %v170 = vpop.f32.mrb[0].mxu0
  %171 = vmatprep.mubr.bf16.mxu0 0
  %172 = vmatmul.mubr.bf16.gmra.mrb[0].mxu0 %v85
  %v173 = vpop.f32.mrb[0].mxu0
  %v174 = vadd.f32 %v54, %v173
  %v175 = vpop.f32.mrb[0].mxu0
  %v176 = vpop.f32.mrb[0].mxu0
  %v177 = vadd.f32 %v54, %v176
  %v178 = vpop.f32.mrb[0].mxu0
  %179 = vmatprep.mubr.bf16.mxu0 0
  %180 = vmatmul.mubr.bf16.gmra.mrb[0].mxu0 %v88
  %v181 = vpop.f32.mrb[0].mxu0
  %v182 = vadd.f32 %v54, %v181
  %v183 = vpop.f32.mrb[0].mxu0
  %v184 = vpop.f32.mrb[0].mxu0
  %v185 = vadd.f32 %v54, %v184
  %v186 = vpop.f32.mrb[0].mxu0
  %187 = vmatprep.mubr.bf16.mxu0 0
  %188 = vmatmul.mubr.bf16.gmra.mrb[0].mxu0 %v91
  %v189 = vpop.f32.mrb[0].mxu0
  %v190 = vadd.f32 %v54, %v189
  %v191 = vpop.f32.mrb[0].mxu0
  %v192 = vpop.f32.mrb[0].mxu0
  %v193 = vadd.f32 %v54, %v192
  %v194 = vpop.f32.mrb[0].mxu0
  %195 = vmatprep.mubr.bf16.mxu0 0
  %196 = vmatmul.mubr.bf16.gmra.mrb[0].mxu0 %v94
  %v197 = vpop.f32.mrb[0].mxu0
  %v198 = vadd.f32 %v54, %v197
  %v199 = vpop.f32.mrb[0].mxu0
  %v200 = vpop.f32.mrb[0].mxu0
  %v201 = vadd.f32 %v54, %v200
  %v202 = vpop.f32.mrb[0].mxu0
  %203 = vmatprep.mubr.bf16.mxu0 0
  %204 = vmatmul.mubr.bf16.gmra.mrb[0].mxu0 %v97
  %v205 = vpop.f32.mrb[0].mxu0
  %v206 = vadd.f32 %v54, %v205
  %v207 = vpop.f32.mrb[0].mxu0
  %v208 = vpop.f32.mrb[0].mxu0
  %v209 = vadd.f32 %v54, %v208
  %v210 = vpop.f32.mrb[0].mxu0
  %211 = vdwg.mxu0
  %212 = vst.msk [vmem:[%s3] sm:$0xff] %vm68, %v134
  %213 = vst.msk [vmem:[%s3 + $0x8] sm:$0xff] %vm68, %v137
  %214 = vst.msk [vmem:[%s3 + $0x10] sm:$0xff] %vm68, %v142
  %215 = vst.msk [vmem:[%s3 + $0x18] sm:$0xff] %vm68, %v145
  %216 = vst.msk [vmem:[%s3 + $0x20] sm:$0xff] %vm68, %v150
  %217 = vst.msk [vmem:[%s3 + $0x28] sm:$0xff] %vm68, %v153
  %218 = vst.msk [vmem:[%s3 + $0x30] sm:$0xff] %vm68, %v158
  %219 = vst.msk [vmem:[%s3 + $0x38] sm:$0xff] %vm68, %v161
  %220 = vst.msk [vmem:[%s3 + $0x40] sm:$0xff] %vm68, %v166
  %221 = vst.msk [vmem:[%s3 + $0x48] sm:$0xff] %vm68, %v169
  %222 = vst.msk [vmem:[%s3 + $0x50] sm:$0xff] %vm68, %v174
  %223 = vst.msk [vmem:[%s3 + $0x58] sm:$0xff] %vm68, %v177
  %224 = vst.msk [vmem:[%s3 + $0x60] sm:$0xff] %vm68, %v182
  %225 = vst.msk [vmem:[%s3 + $0x68] sm:$0xff] %vm68, %v185
  %226 = vst.msk [vmem:[%s3 + $0x70] sm:$0xff] %vm68, %v190
  %227 = vst.msk [vmem:[%s3 + $0x78] sm:$0xff] %vm68, %v193
  %228 = vst.msk [vmem:[%s3 + $0x80] sm:$0xff] %vm68, %v198
  %229 = vst.msk [vmem:[%s3 + $0x88] sm:$0xff] %vm68, %v201
  %230 = vst.msk [vmem:[%s3 + $0x90] sm:$0xff] %vm68, %v206
  %231 = vst.msk [vmem:[%s3 + $0x98] sm:$0xff] %vm68, %v209
  // Predicated region
  $region14: #{tpu_custom_call.1} parent=0 // pred_check
    _
  $region15: #{tpu_custom_call.1} parent=0 // pred_check_branch
    %233 = sbr.rel (0) target = $region17
  $region16: #{tpu_custom_call.1} parent=0 // pred_region
    _
  $region17: #{tpu_custom_call.1} parent=0 // pred_fallthru
    _
  // Predicated region
  $region18: #{tpu_custom_call.1} parent=0 // pred_check
    _
  $region19: #{tpu_custom_call.1} parent=0 // pred_check_branch
    %235 = sbr.rel (0) target = $region21
  $region20: #{tpu_custom_call.1} parent=0 // pred_region
    _
  $region21: #{tpu_custom_call.1} parent=0 // pred_fallthru
    _

</llo_original>
